<compile_context>
chip_gen: v6e
topology: v6e:2x2x1
jax: 0.10.0
libtpu: 0.0.40
codegen_flags: <defaults>
</compile_context>

<pallas_src>
from collections import OrderedDict

import jax
import jax.numpy as jnp
from jax.experimental import pallas as pl
from jax.experimental.pallas import tpu as pltpu


# ----------------------------------------------------------------------------
# Kernel 1: fused encoder + (class || reg) decoder 1x1 convs, channels-first.
#   x block:    (1, Cin,    T)      lanes = T (>=128-dense when possible)
#   out block:  (1, 2*Pout, T)
# ----------------------------------------------------------------------------
def _trunk_kernel(x_ref, wenc_ref, benc_ref, wdec_ref, bdec_ref, o_ref):
    x = x_ref[0]                                                       # (Cin, T)
    feat = jnp.dot(wenc_ref[...], x, preferred_element_type=jnp.float32)
    feat = jnp.maximum(feat + benc_ref[...], 0.0)                      # (Pin, T)
    both = jnp.dot(wdec_ref[...], feat, preferred_element_type=jnp.float32)
    both = jnp.maximum(both + bdec_ref[...], 0.0)                      # (2*Pout, T)
    o_ref[0] = both.astype(o_ref.dtype)


def trunk_forward(x_flat, wenc_t, benc, wdec_t, bdec):
    """x_flat: (N, Cin, H*W) -> (N, 2*Pout, H*W); no transposes needed."""
    N, Cin, HW = x_flat.shape
    Pin = wenc_t.shape[0]
    C2 = wdec_t.shape[0]

    # lane-dense pixel tiles; fall back to the full row when HW is small
    tile_hw = 512 if HW >= 512 else HW
    n_t = pl.cdiv(HW, tile_hw)

    flops = 2 * (Cin * Pin + Pin * C2) * N * HW
    bytes_acc = 4 * (N * Cin * HW + N * C2 * HW
                     + Pin * Cin + C2 * Pin + Pin + C2)

    return pl.pallas_call(
        _trunk_kernel,
        out_shape=jax.ShapeDtypeStruct((N, C2, HW), jnp.float32),
        grid=(N, n_t),
        in_specs=[
            pl.BlockSpec((1, Cin, tile_hw), lambda n, t: (n, 0, t)),
            pl.BlockSpec((Pin, Cin), lambda n, t: (0, 0)),
            pl.BlockSpec((Pin, 1), lambda n, t: (0, 0)),
            pl.BlockSpec((C2, Pin), lambda n, t: (0, 0)),
            pl.BlockSpec((C2, 1), lambda n, t: (0, 0)),
        ],
        out_specs=pl.BlockSpec((1, C2, tile_hw), lambda n, t: (n, 0, t)),
        compiler_params=pltpu.CompilerParams(
            dimension_semantics=("parallel", "parallel"),
            vmem_limit_bytes=32 * 1024 * 1024),
        cost_estimate=pl.CostEstimate(flops=flops, transcendentals=0,
                                      bytes_accessed=bytes_acc),
    )(x_flat, wenc_t, benc, wdec_t, bdec)


# ----------------------------------------------------------------------------
# Kernel 2: fused [all head 1x1 convs + selective ReLU + bilinear x4 upsample]
#   feat block: (1, 2*Pout*H, W)   (row index = c*H + h, channels-major)
#   conv:       y   = Wk  @ feat + b      Wk  = blockdiag/kron(W_head^T, I_H)
#   ReLU mask:  applied only to rows of heads whose PyTorch path uses F.relu
#   row pass:   t   = Mhk @ y             Mhk = kron(I_{Call}, Mh)
#   col pass:   out = t @ MwT
#   out block:  (1, Call*Ho, Wo)
# Pure 2-D matmuls -> no in-kernel reshape / transpose, all MXU work.
# ----------------------------------------------------------------------------
def _heads_kernel(feat_ref, wk_ref, bk_ref, mask_ref, mhk_ref, mwt_ref, o_ref):
    f = feat_ref[0]                                                    # (2*Pout*H, W)
    y = jnp.dot(wk_ref[...], f, preferred_element_type=jnp.float32) + bk_ref[...]
    y = jnp.where(mask_ref[...] > 0.5, jnp.maximum(y, 0.0), y)         # (Call*H, W)
    t = jnp.dot(mhk_ref[...], y, preferred_element_type=jnp.float32)   # (Call*Ho, W)
    o_ref[0] = jnp.dot(t, mwt_ref[...],
                       preferred_element_type=jnp.float32).astype(o_ref.dtype)


def heads_forward(both_feat, w_all, b_all, relu_mask, mh_all, mwt):
    """both_feat: (N, 2*Pout*H, W) -> (N, Call*Ho, Wo)."""
    N, KH, W = both_feat.shape
    CH = w_all.shape[0]          # Call * H
    CHo = mh_all.shape[0]        # Call * Ho
    Wo = mwt.shape[1]

    flops = 2 * N * (CH * KH * W + CHo * CH * W + CHo * W * Wo)
    bytes_acc = 4 * (N * KH * W + N * CHo * Wo + w_all.size + mh_all.size
                     + mwt.size + b_all.size + relu_mask.size)

    return pl.pallas_call(
        _heads_kernel,
        out_shape=jax.ShapeDtypeStruct((N, CHo, Wo), jnp.float32),
        grid=(N,),
        in_specs=[
            pl.BlockSpec((1, KH, W), lambda n: (n, 0, 0)),
            pl.BlockSpec((CH, KH), lambda n: (0, 0)),
            pl.BlockSpec((CH, 1), lambda n: (0, 0)),
            pl.BlockSpec((CH, 1), lambda n: (0, 0)),
            pl.BlockSpec((CHo, CH), lambda n: (0, 0)),
            pl.BlockSpec((W, Wo), lambda n: (0, 0)),
        ],
        out_specs=pl.BlockSpec((1, CHo, Wo), lambda n: (n, 0, 0)),
        compiler_params=pltpu.CompilerParams(
            dimension_semantics=("parallel",),
            vmem_limit_bytes=32 * 1024 * 1024),
        cost_estimate=pl.CostEstimate(flops=flops, transcendentals=0,
                                      bytes_accessed=bytes_acc),
    )(both_feat, w_all, b_all, relu_mask, mh_all, mwt)


# ----------------------------------------------------------------------------
# Host-side constant builders
# ----------------------------------------------------------------------------
def _interp_matrix(n_in, n_out):
    """[n_out, n_in] linear-interp matrix for align_corners=True."""
    idx = jnp.arange(n_out, dtype=jnp.float32)
    if n_out == 1:
        src = jnp.zeros((1,), jnp.float32)
    else:
        src = idx * (n_in - 1) / (n_out - 1)
    i0 = jnp.clip(jnp.floor(src).astype(jnp.int32), 0, n_in - 1)
    i1 = jnp.clip(i0 + 1, 0, n_in - 1)
    frac = src - i0.astype(jnp.float32)
    cols = jnp.arange(n_in)
    m = ((cols[None, :] == i0[:, None]).astype(jnp.float32) * (1.0 - frac)[:, None]
         + (cols[None, :] == i1[:, None]).astype(jnp.float32) * frac[:, None])
    return m


def build_head_operators(head_specs, p_out, H, W):
    """Build the fused head operators.

    head_specs: list of (name, w[Pout,Ch], b[Ch], relu: bool, path: 'class'|'reg')
    Returns (w_all, b_all, relu_mask, mh_all, mwt, slices, call).
    """
    Ho, Wo = 4 * H, 4 * W
    eye_h = jnp.eye(H, dtype=jnp.float32)
    mh = _interp_matrix(H, Ho)                 # (Ho, H)
    mwt = _interp_matrix(W, Wo).T              # (W, Wo)

    w_blocks, b_rows, mask_rows = [], [], []
    slices = OrderedDict()
    off = 0
    for name, w, b, relu, path in head_specs:
        ch = w.shape[1]
        wk = jnp.kron(w.T, eye_h)              # (ch*H, Pout*H)
        zeros = jnp.zeros_like(wk)
        # class-path heads read rows [0, Pout*H); reg-path heads read the rest
        blk = jnp.concatenate([wk, zeros] if path == 'class' else [zeros, wk],
                              axis=1)          # (ch*H, 2*Pout*H)
        w_blocks.append(blk)
        b_rows.append(jnp.repeat(b.astype(jnp.float32), H))
        mask_rows.append(jnp.full((ch * H,), 1.0 if relu else 0.0, jnp.float32))
        slices[name] = (off, off + ch)
        off += ch

    call = off
    if call == 0:
        return None, None, None, None, mwt, slices, 0
    w_all = jnp.concatenate(w_blocks, axis=0)                      # (call*H, 2*Pout*H)
    b_all = jnp.concatenate(b_rows).reshape(-1, 1)                 # (call*H, 1)
    relu_mask = jnp.concatenate(mask_rows).reshape(-1, 1)          # (call*H, 1)
    mh_all = jnp.kron(jnp.eye(call, dtype=jnp.float32), mh)        # (call*Ho, call*H)
    return w_all, b_all, relu_mask, mh_all, mwt, slices, call


# ----------------------------------------------------------------------------
# Module-level helpers / forward replica
# ----------------------------------------------------------------------------
def get_intermediate_result(model, output):
    encoder = model['encoder']
    decoder = model['decoder']
    intermediate_result = OrderedDict()
    layers = [k for k, _ in output.items()]
    if 'resnet' in encoder and 'fpn' in decoder:
        layers = layers[:-1]
    elif 'efficientnet' in encoder and 'fcn' in decoder:
        layers = layers[1:]
    for layer in layers:
        intermediate_result[layer] = output[layer]
    return intermediate_result, layers


class EncoderDecoderPallas:
    def __init__(self, cfg, in_channels, in_planes, out_planes, key):
        self.cfg = cfg
        self.model = cfg['model']
        self.heads = cfg['model']['outputs']
        self.pin = in_planes[-1]
        self.pout = out_planes[-1]
        ks = list(jax.random.split(key, 16))

        def init_conv(kw, kb, cin, cout):
            w = jax.random.normal(kw, (cin, cout), jnp.float32) * 0.1
            b = jax.random.normal(kb, (cout,), jnp.float32) * 0.1
            return w, b

        # synthetic encoder: 1x1 conv  in_channels -> in_planes[-1]  (+ ReLU)
        self.enc_w, self.enc_b = init_conv(ks[0], ks[1], in_channels, self.pin)
        # synthetic decoders: 1x1 conv in_planes[-1] -> out_planes[-1] (+ ReLU)
        self.cls_dec_w, self.cls_dec_b = init_conv(ks[2], ks[3], self.pin, self.pout)
        self.reg_dec_w, self.reg_dec_b = init_conv(ks[4], ks[5], self.pin, self.pout)
        # task heads: 1x1 conv out_planes[-1] -> head out_channels
        self.head_params = {}
        ki = 6
        for name in ('semantic', 'instance_regression', 'instance_heatmap',
                     'instance_probs'):
            if self.heads[name]['active']:
                self.head_params[name] = init_conv(
                    ks[ki], ks[ki + 1], self.pout, self.heads[name]['out_channels'])
                ki += 2

        # --- fused trunk operators (decoder weights concatenated on Cout) ---
        self.wenc_t = self.enc_w.T                                    # (Pin, Cin)
        self.benc = self.enc_b.reshape(-1, 1)
        self.wdec_t = jnp.concatenate([self.cls_dec_w, self.reg_dec_w], axis=1).T
        self.bdec = jnp.concatenate([self.cls_dec_b, self.reg_dec_b]).reshape(-1, 1)

        self._head_cache = {}

    def _head_ops(self, H, W):
        key = (H, W)
        if key not in self._head_cache:
            specs = []
            if self.heads['semantic']['active']:
                w, b = self.head_params['semantic']
                specs.append(('semantic', w, b, True, 'class'))
            if self.heads['instance_probs']['active']:
                w, b = self.head_params['instance_probs']
                specs.append(('instance_probs', w, b, True, 'class'))
            if self.heads['instance_regression']['active']:
                w, b = self.head_params['instance_regression']
                specs.append(('instance_regression', w, b, False, 'reg'))
            if self.heads['instance_heatmap']['active']:
                w, b = self.head_params['instance_heatmap']
                specs.append(('instance_heatmap', w, b, False, 'reg'))
            self._head_cache[key] = build_head_operators(specs, self.pout, H, W)
        return self._head_cache[key]

    def forward(self, x):
        N, Cin, H, W = x.shape
        HW = H * W

        # layer-selection logic of the original module (stand-in encoder
        # produces a single feature layer, so sum-over-layers == identity and
        # encoder + both decoders fuse into the trunk kernel)
        _, _layers = get_intermediate_result(self.model, {'layer1': None})

        x_flat = x.reshape(N, Cin, HW)                       # free reshape (stays NCHW)
        both = trunk_forward(x_flat, self.wenc_t, self.benc, self.wdec_t, self.bdec)
        both2 = both.reshape(N, 2 * self.pout * H, W)        # free reshape

        w_all, b_all, relu_mask, mh_all, mwt, slices, call = self._head_ops(H, W)
        outputs = {}
        if call == 0:
            return outputs

        up = heads_forward(both2, w_all, b_all, relu_mask, mh_all, mwt)
        up4 = up.reshape(N, call, 4 * H, 4 * W)              # free reshape -> NCHW

        for name in ('semantic', 'instance_regression', 'instance_heatmap',
                     'instance_probs'):
            if name in slices:
                c0, c1 = slices[name]
                outputs[name] = up4[:, c0:c1]
        return outputs


# ----------------------------------------------------------------------------
# Pure-JAX reference (for a correctness sanity check)
# ----------------------------------------------------------------------------
def _ref_conv1x1(x, w, b, relu=False):
    y = jnp.einsum('nchw,ck->nkhw', x, w) + b[None, :, None, None]
    return jnp.maximum(y, 0.0) if relu else y


def _ref_upsample4(x):
    N, C, H, W = x.shape
    mh = _interp_matrix(H, 4 * H)
    mw = _interp_matrix(W, 4 * W)
    return jnp.einsum('oh,nchw,pw->ncop', mh, x, mw)


if __name__ == "__main__":
    key = jax.random.PRNGKey(0)
    k_in, k_params = jax.random.split(key)

    N, Cin, H, W = 2, 4, 16, 16
    in_planes, out_planes = [8], [16]
    cfg = {'model': {
        'encoder': 'simple_encoder',
        'decoder': 'simple_decoder',
        'outputs': {
            'semantic':             {'active': True, 'out_channels': 5},
            'instance_regression':  {'active': True, 'out_channels': 2},
            'instance_heatmap':     {'active': True, 'out_channels': 1},
            'instance_probs':       {'active': True, 'out_channels': 3},
        }}}

    x = jax.random.normal(k_in, (N, Cin, H, W), jnp.float32)
    model = EncoderDecoderPallas(cfg, Cin, in_planes, out_planes, k_params)

    outputs = model.forward(x)
    jax.block_until_ready(outputs)

    # sanity check against a pure-JAX reference of the same pipeline
    feat = _ref_conv1x1(x, model.enc_w, model.enc_b, relu=True)
    cls_feat = _ref_conv1x1(feat, model.cls_dec_w, model.cls_dec_b, relu=True)
    reg_feat = _ref_conv1x1(feat, model.reg_dec_w, model.reg_dec_b, relu=True)
    ref = {
        'semantic': _ref_upsample4(
            _ref_conv1x1(cls_feat, *model.head_params['semantic'], relu=True)),
        'instance_regression': _ref_upsample4(
            _ref_conv1x1(reg_feat, *model.head_params['instance_regression'])),
        'instance_heatmap': _ref_upsample4(
            _ref_conv1x1(reg_feat, *model.head_params['instance_heatmap'])),
        'instance_probs': _ref_upsample4(
            _ref_conv1x1(cls_feat, *model.head_params['instance_probs'], relu=True)),
    }
    for name in outputs:
        expected = (N, cfg['model']['outputs'][name]['out_channels'], 4 * H, 4 * W)
        assert outputs[name].shape == expected, (name, outputs[name].shape)
        assert jnp.allclose(outputs[name], ref[name], atol=1e-3, rtol=1e-3), name

    print("KERNEL_OK")
</pallas_src>

<mosaic_0001>
module attributes {stable_mosaic.version = 11 : i64} {
  func.func @_trunk_kernel(%arg0: i32, %arg1: i32, %arg2: memref<1x4x256xf32, #tpu.memory_space<vmem>>, %arg3: memref<8x4xf32, #tpu.memory_space<vmem>>, %arg4: memref<8x1xf32, #tpu.memory_space<vmem>>, %arg5: memref<32x8xf32, #tpu.memory_space<vmem>>, %arg6: memref<32x1xf32, #tpu.memory_space<vmem>>, %arg7: memref<1x32x256xf32, #tpu.memory_space<vmem>>) attributes {dimension_semantics = [#tpu.dimension_semantics<parallel>, #tpu.dimension_semantics<parallel>], iteration_bounds = array<i64: 2, 1>, scalar_prefetch = 0 : i64, scratch_operands = 0 : i64, tpu.core_type = #tpu.core_type<tc>, window_params = [{transform_indices = @transform_0, window_bounds = array<i64: 1, 4, 256>}, {pipeline_mode = #tpu.pipeline_mode<synchronous>, transform_indices = @transform_1, window_bounds = array<i64: 8, 4>}, {pipeline_mode = #tpu.pipeline_mode<synchronous>, transform_indices = @transform_2, window_bounds = array<i64: 8, 1>}, {pipeline_mode = #tpu.pipeline_mode<synchronous>, transform_indices = @transform_3, window_bounds = array<i64: 32, 8>}, {pipeline_mode = #tpu.pipeline_mode<synchronous>, transform_indices = @transform_4, window_bounds = array<i64: 32, 1>}, {transform_indices = @transform_5, window_bounds = array<i64: 1, 32, 256>}]} {
    %c0 = arith.constant 0 : index
    %c0_0 = arith.constant 0 : index
    %c0_1 = arith.constant 0 : index
    %0 = vector.load %arg2[%c0, %c0_0, %c0_1] : memref<1x4x256xf32, #tpu.memory_space<vmem>>, vector<1x4x256xf32>
    %1 = vector.shape_cast %0 : vector<1x4x256xf32> to vector<4x256xf32>
    %c0_2 = arith.constant 0 : index
    %c0_3 = arith.constant 0 : index
    %2 = vector.load %arg3[%c0_2, %c0_3] : memref<8x4xf32, #tpu.memory_space<vmem>>, vector<8x4xf32>
    %cst = arith.constant dense<0.000000e+00> : vector<8x256xf32>
    %3 = tpu.matmul %2, %1, %cst {dimension_numbers = #tpu.dot_dimension_numbers<[1], [0], [0], [1], [0, 0, 1, 1], [], []>} : vector<8x4xf32>, vector<4x256xf32>, vector<8x256xf32> -> vector<8x256xf32>
    %c0_4 = arith.constant 0 : index
    %c0_5 = arith.constant 0 : index
    %4 = vector.load %arg4[%c0_4, %c0_5] : memref<8x1xf32, #tpu.memory_space<vmem>>, vector<8x1xf32>
    %5 = vector.broadcast %4 : vector<8x1xf32> to vector<8x256xf32>
    %6 = arith.addf %3, %5 : vector<8x256xf32>
    %cst_6 = arith.constant 0.000000e+00 : f32
    %7 = vector.broadcast %cst_6 : f32 to vector<8x256xf32>
    %8 = arith.maximumf %6, %7 : vector<8x256xf32>
    %c0_7 = arith.constant 0 : index
    %c0_8 = arith.constant 0 : index
    %9 = vector.load %arg5[%c0_7, %c0_8] : memref<32x8xf32, #tpu.memory_space<vmem>>, vector<32x8xf32>
    %cst_9 = arith.constant dense<0.000000e+00> : vector<32x256xf32>
    %10 = tpu.matmul %9, %8, %cst_9 {dimension_numbers = #tpu.dot_dimension_numbers<[1], [0], [0], [1], [0, 0, 1, 1], [], []>} : vector<32x8xf32>, vector<8x256xf32>, vector<32x256xf32> -> vector<32x256xf32>
    %c0_10 = arith.constant 0 : index
    %c0_11 = arith.constant 0 : index
    %11 = vector.load %arg6[%c0_10, %c0_11] : memref<32x1xf32, #tpu.memory_space<vmem>>, vector<32x1xf32>
    %12 = vector.broadcast %11 : vector<32x1xf32> to vector<32x256xf32>
    %13 = arith.addf %10, %12 : vector<32x256xf32>
    %cst_12 = arith.constant 0.000000e+00 : f32
    %14 = vector.broadcast %cst_12 : f32 to vector<32x256xf32>
    %15 = arith.maximumf %13, %14 : vector<32x256xf32>
    %c0_13 = arith.constant 0 : index
    %c0_14 = arith.constant 0 : index
    %c0_15 = arith.constant 0 : index
    %16 = vector.load %arg7[%c0_13, %c0_14, %c0_15] : memref<1x32x256xf32, #tpu.memory_space<vmem>>, vector<1x32x256xf32>
    %17 = vector.shape_cast %16 : vector<1x32x256xf32> to vector<32x256xf32>
    %18 = vector.shape_cast %15 : vector<32x256xf32> to vector<1x32x256xf32>
    tpu.vector_store %arg7[%c0_13, %c0_14, %c0_15], %18 {strides = array<i32>} : memref<1x32x256xf32, #tpu.memory_space<vmem>>, vector<1x32x256xf32>,
    return
  }
  func.func @transform_0(%arg0: i32, %arg1: i32) -> (i32, i32, i32) {
    %c0_i32 = arith.constant 0 : i32
    %c0_i32_0 = arith.constant 0 : i32
    return %arg0, %c0_i32, %arg1 : i32, i32, i32
  }
  func.func @transform_1(%arg0: i32, %arg1: i32) -> (i32, i32) {
    %c0_i32 = arith.constant 0 : i32
    %c0_i32_0 = arith.constant 0 : i32
    %c0_i32_1 = arith.constant 0 : i32
    return %c0_i32, %c0_i32_0 : i32, i32
  }
  func.func @transform_2(%arg0: i32, %arg1: i32) -> (i32, i32) {
    %c0_i32 = arith.constant 0 : i32
    %c0_i32_0 = arith.constant 0 : i32
    %c0_i32_1 = arith.constant 0 : i32
    return %c0_i32, %c0_i32_0 : i32, i32
  }
  func.func @transform_3(%arg0: i32, %arg1: i32) -> (i32, i32) {
    %c0_i32 = arith.constant 0 : i32
    %c0_i32_0 = arith.constant 0 : i32
    %c0_i32_1 = arith.constant 0 : i32
    return %c0_i32, %c0_i32_0 : i32, i32
  }
  func.func @transform_4(%arg0: i32, %arg1: i32) -> (i32, i32) {
    %c0_i32 = arith.constant 0 : i32
    %c0_i32_0 = arith.constant 0 : i32
    %c0_i32_1 = arith.constant 0 : i32
    return %c0_i32, %c0_i32_0 : i32, i32
  }
  func.func @transform_5(%arg0: i32, %arg1: i32) -> (i32, i32, i32) {
    %c0_i32 = arith.constant 0 : i32
    %c0_i32_0 = arith.constant 0 : i32
    return %arg0, %c0_i32, %arg1 : i32, i32, i32
  }
}

</mosaic_0001>

<llo_original>
// kernel: tpu_custom_call.1
$region0: #{tpu_custom_call.1}
  #allocation0 [shape = 'u32[]', space=smem, size = 0x4, offset = 0x4, fixed_abs, tag = 'smem constant byte address 0x4 - core index']
  #allocation1 [shape = 'u32[144,128]{1,0:T(1,128)}', space=vmem, size = 0x12000, scoped, tag = 'internal scratch']
  %s0 = inlined_call_operand.vmem [shape: f32[2,4,256], index: 0, kind: input, shape index: {}]
  %s1 = inlined_call_operand.vmem [shape: f32[8,4], index: 1, kind: input, shape index: {}]
  %s2 = inlined_call_operand.vmem [shape: f32[8,1], index: 2, kind: input, shape index: {}]
  %s3 = inlined_call_operand.vmem [shape: f32[32,8], index: 3, kind: input, shape index: {}]
  %s4 = inlined_call_operand.vmem [shape: f32[32,1], index: 4, kind: input, shape index: {}]
  %s5 = inlined_call_operand.hbm [shape: f32[2,32,256], index: 5, kind: output, shape index: {}]
  %s6 = sld [smem:[#allocation0]]
  $region53: #{tpu_custom_call.1} parent=0
    _
  %s8 = ssub.s32 1, %s6
  %s9 = scalar_select 0, %s8, %s6
  $region1: #{tpu_custom_call.1} parent=0
    #allocation2 [shape = 'u8[65536]{0}', space=vmem, size = 0x10000, scoped, tag = 'output window, operand 0']
    #allocation3 [shape = 's32[2]{0}', space=sflag, size = 0x8, scoped, tag = 'scoped memory for tpu_custom_call.1']
    %10 = vsyncpa [#allocation3], 0
    %s11 = scalar_lea.sflag [#allocation3], 1
    %12 = vsyncpa %s11, 0
    loop: start=0, step=1, limit=4
    $region2: #{tpu_custom_call.1} parent=1 // loop_pre_header
      _
    $region3: #{tpu_custom_call.1} parent=1 // loop_header
      %s14 = sphi 0, %s18
      %p15 = scmp.ge.s32.totalorder %s14, 4
      %s21 = sphi 0, %s33
      %s22 = sphi 0, %s29
      %s23 = sphi 0, %s21
      %s24 = sphi 0, %s22
      %s25 = sphi 0, %s23
      %s26 = sphi 0, %s24
      %s38 = sphi 0, %s40
      %s41 = sphi 0, %s38
      %s42 = sphi 0, %s41
      %s58 = sphi 0, %s42
      %s62 = sphi 0, %s62
      %s64 = sphi 0, %s62
      %s65 = sphi 0, %s64
      %s79 = sphi 0, %s65
      %s83 = sphi 0, %s83
      %s85 = sphi 0, %s83
      %s86 = sphi 0, %s85
      %s100 = sphi 0, %s86
      %s104 = sphi 0, %s104
      %s106 = sphi 0, %s104
      %s107 = sphi 0, %s106
      %s121 = sphi 0, %s107
      %s125 = sphi 0, %s125
      %s127 = sphi 0, %s125
      %s128 = sphi 0, %s127
      %s142 = sphi 0, %s128
      %s150 = sphi 0, %s152
      %s153 = sphi 0, %s150
      %s154 = sphi 0, %s153
      %s170 = sphi 0, %s154
    $region4: #{tpu_custom_call.1} parent=1 // loop_header_branch
      %17 = sbr.rel (%p15) target = $region8
    $region5: #{tpu_custom_call.1} parent=1 // loop_body
      %s19 = ssub.s32 %s14, 1
      %s20 = ssub.s32 %s14, 2
      %s27 = sadd.s32 1, %s22
      %p28 = scmp.ge.s32.totalorder %s27, 1
      %s29 = scalar_select %p28, 0, %s27
      %s30 = sadd.s32 1, %s21
      %s31 = scalar_select %p28, %s30, %s21
      %p32 = scmp.ge.s32.totalorder %s31, 2
      %s33 = scalar_select %p32, 0, %s31
      %s34 = ssub.s32 %s21, %s33
      %s35 = ssub.s32 %s22, %s29
      %s36 = sor.u32 %s34, %s35
      %p37 = scmp.eq.s32.totalorder %s36, 0
      %s39 = sadd.s32 %s38, 1
      %s40 = scalar_select %p37, %s38, %s39
      %p43 = pneg %p37
      %p44 = scmp.eq.s32.totalorder %s14, 1
      %p45 = por %p43, %p44
      %p46 = scmp.ne.s32.totalorder %s38, %s41
      %p47 = scmp.eq.s32.totalorder %s14, 0
      %p48 = por %p46, %p47
      %p49 = scmp.ne.s32.totalorder %s38, %s41
      %p50 = scmp.eq.s32.totalorder %s19, 1
      %p51 = por %p49, %p50
      %p52 = scmp.ne.s32.totalorder %s41, %s42
      %p53 = scmp.eq.s32.totalorder %s19, 0
      %p54 = por %p52, %p53
      %p55 = scmp.ne.s32.totalorder %s41, %s42
      %p56 = scmp.eq.s32.totalorder %s20, 1
      %p57 = por %p55, %p56
      %p59 = scmp.ne.s32.totalorder %s42, %s58
      %p60 = scmp.eq.s32.totalorder %s20, 0
      %p61 = por %p59, %p60
      %s63 = sadd.s32 %s62, 1
      %p66 = scmp.eq.s32.totalorder %s14, 1
      %p67 = scmp.ne.s32.totalorder %s62, %s64
      %p68 = scmp.eq.s32.totalorder %s14, 0
      %p69 = por %p67, %p68
      %p70 = scmp.ne.s32.totalorder %s62, %s64
      %p71 = scmp.eq.s32.totalorder %s19, 1
      %p72 = por %p70, %p71
      %p73 = scmp.ne.s32.totalorder %s64, %s65
      %p74 = scmp.eq.s32.totalorder %s19, 0
      %p75 = por %p73, %p74
      %p76 = scmp.ne.s32.totalorder %s64, %s65
      %p77 = scmp.eq.s32.totalorder %s20, 1
      %p78 = por %p76, %p77
      %p80 = scmp.ne.s32.totalorder %s65, %s79
      %p81 = scmp.eq.s32.totalorder %s20, 0
      %p82 = por %p80, %p81
      %s84 = sadd.s32 %s83, 1
      %p87 = scmp.eq.s32.totalorder %s14, 1
      %p88 = scmp.ne.s32.totalorder %s83, %s85
      %p89 = scmp.eq.s32.totalorder %s14, 0
      %p90 = por %p88, %p89
      %p91 = scmp.ne.s32.totalorder %s83, %s85
      %p92 = scmp.eq.s32.totalorder %s19, 1
      %p93 = por %p91, %p92
      %p94 = scmp.ne.s32.totalorder %s85, %s86
      %p95 = scmp.eq.s32.totalorder %s19, 0
      %p96 = por %p94, %p95
      %p97 = scmp.ne.s32.totalorder %s85, %s86
      %p98 = scmp.eq.s32.totalorder %s20, 1
      %p99 = por %p97, %p98
      %p101 = scmp.ne.s32.totalorder %s86, %s100
      %p102 = scmp.eq.s32.totalorder %s20, 0
      %p103 = por %p101, %p102
      %s105 = sadd.s32 %s104, 1
      %p108 = scmp.eq.s32.totalorder %s14, 1
      %p109 = scmp.ne.s32.totalorder %s104, %s106
      %p110 = scmp.eq.s32.totalorder %s14, 0
      %p111 = por %p109, %p110
      %p112 = scmp.ne.s32.totalorder %s104, %s106
      %p113 = scmp.eq.s32.totalorder %s19, 1
      %p114 = por %p112, %p113
      %p115 = scmp.ne.s32.totalorder %s106, %s107
      %p116 = scmp.eq.s32.totalorder %s19, 0
      %p117 = por %p115, %p116
      %p118 = scmp.ne.s32.totalorder %s106, %s107
      %p119 = scmp.eq.s32.totalorder %s20, 1
      %p120 = por %p118, %p119
      %p122 = scmp.ne.s32.totalorder %s107, %s121
      %p123 = scmp.eq.s32.totalorder %s20, 0
      %p124 = por %p122, %p123
      %s126 = sadd.s32 %s125, 1
      %p129 = scmp.eq.s32.totalorder %s14, 1
      %p130 = scmp.ne.s32.totalorder %s125, %s127
      %p131 = scmp.eq.s32.totalorder %s14, 0
      %p132 = por %p130, %p131
      %p133 = scmp.ne.s32.totalorder %s125, %s127
      %p134 = scmp.eq.s32.totalorder %s19, 1
      %p135 = por %p133, %p134
      %p136 = scmp.ne.s32.totalorder %s127, %s128
      %p137 = scmp.eq.s32.totalorder %s19, 0
      %p138 = por %p136, %p137
      %p139 = scmp.ne.s32.totalorder %s127, %s128
      %p140 = scmp.eq.s32.totalorder %s20, 1
      %p141 = por %p139, %p140
      %p143 = scmp.ne.s32.totalorder %s128, %s142
      %p144 = scmp.eq.s32.totalorder %s20, 0
      %p145 = por %p143, %p144
      %s146 = ssub.s32 %s21, %s33
      %s147 = ssub.s32 %s22, %s29
      %s148 = sor.u32 %s146, %s147
      %p149 = scmp.eq.s32.totalorder %s148, 0
      %s151 = sadd.s32 %s150, 1
      %s152 = scalar_select %p149, %s150, %s151
      %p155 = pneg %p149
      %p156 = scmp.eq.s32.totalorder %s14, 1
      %p157 = por %p155, %p156
      %p158 = scmp.ne.s32.totalorder %s150, %s153
      %p159 = scmp.eq.s32.totalorder %s14, 0
      %p160 = por %p158, %p159
      %p161 = scmp.ne.s32.totalorder %s150, %s153
      %p162 = scmp.eq.s32.totalorder %s19, 1
      %p163 = por %p161, %p162
      %p164 = scmp.ne.s32.totalorder %s153, %s154
      %p165 = scmp.eq.s32.totalorder %s19, 0
      %p166 = por %p164, %p165
      %p167 = scmp.ne.s32.totalorder %s153, %s154
      %p168 = scmp.eq.s32.totalorder %s20, 1
      %p169 = por %p167, %p168
      %p171 = scmp.ne.s32.totalorder %s154, %s170
      %p172 = scmp.eq.s32.totalorder %s20, 0
      %p173 = por %p171, %p172
      %p174 = scmp.le.s32.totalorder 1, %s14
      %p175 = scmp.lt.s32.totalorder %s14, 3
      %p176 = pnand %p174, %p175
      %p177 = pneg %p176
      // Predicated region
      $region9: #{tpu_custom_call.1} parent=5 // pred_check
        _
      $region10: #{tpu_custom_call.1} parent=5 // pred_check_branch
        %179 = sbr.rel (%p176) target = $region12
      $region11: #{tpu_custom_call.1} parent=5 // pred_region
        %s180 = ssub.s32 %s14, 1
        // Predicated region
        $region13: #{tpu_custom_call.1} parent=11 // pred_check
          %p181 = pneg %p75
        $region14: #{tpu_custom_call.1} parent=11 // pred_check_branch
          %183 = sbr.rel (%p181) target = $region16
        $region15: #{tpu_custom_call.1} parent=11 // pred_region
          _
        $region16: #{tpu_custom_call.1} parent=11 // pred_fallthru
          _
        // Predicated region
        $region17: #{tpu_custom_call.1} parent=11 // pred_check
          %p184 = pneg %p96
        $region18: #{tpu_custom_call.1} parent=11 // pred_check_branch
          %186 = sbr.rel (%p184) target = $region20
        $region19: #{tpu_custom_call.1} parent=11 // pred_region
          _
        $region20: #{tpu_custom_call.1} parent=11 // pred_fallthru
          _
        // Predicated region
        $region21: #{tpu_custom_call.1} parent=11 // pred_check
          %p187 = pneg %p117
        $region22: #{tpu_custom_call.1} parent=11 // pred_check_branch
          %189 = sbr.rel (%p187) target = $region24
        $region23: #{tpu_custom_call.1} parent=11 // pred_region
          _
        $region24: #{tpu_custom_call.1} parent=11 // pred_fallthru
          _
        // Predicated region
        $region25: #{tpu_custom_call.1} parent=11 // pred_check
          %p190 = pneg %p138
        $region26: #{tpu_custom_call.1} parent=11 // pred_check_branch
          %192 = sbr.rel (%p190) target = $region28
        $region27: #{tpu_custom_call.1} parent=11 // pred_region
          _
        $region28: #{tpu_custom_call.1} parent=11 // pred_fallthru
          _
      $region12: #{tpu_custom_call.1} parent=5 // pred_fallthru
        _
      %p193 = scmp.lt.s32.totalorder %s14, 2
      // Predicated region
      $region29: #{tpu_custom_call.1} parent=5 // pred_check
        %p194 = pneg %p193
      $region30: #{tpu_custom_call.1} parent=5 // pred_check_branch
        %196 = sbr.rel (%p194) target = $region32
      $region31: #{tpu_custom_call.1} parent=5 // pred_region
        // Predicated region
        $region33: #{tpu_custom_call.1} parent=31 // pred_check
          %p197 = pneg %p48
        $region34: #{tpu_custom_call.1} parent=31 // pred_check_branch
          %199 = sbr.rel (%p197) target = $region36
        $region35: #{tpu_custom_call.1} parent=31 // pred_region
          %s200 = smul.u32 2, %s22
          %p201 = scmp.lt.s32.totalorder %s21, 1
          %s202 = scalar_select %p201, %s21, 1
          %p203 = scmp.lt.s32.totalorder %s200, 1
          %s204 = scalar_select %p203, %s200, 1
          %s205 = smul.addr %s202, 2
          %s206 = sadd.s32 %s204, %s205
          %s207 = smul.addr %s206, 4
          %s208 = scalar_lea.vmem %s0, %s207
          %s209 = smul.u32 2, %s22
        $region36: #{tpu_custom_call.1} parent=31 // pred_fallthru
          _
      $region32: #{tpu_custom_call.1} parent=5 // pred_fallthru
        _
      %p210 = scmp.le.s32.totalorder 1, %s14
      %p211 = scmp.lt.s32.totalorder %s14, 3
      %p212 = pnand %p210, %p211
      %p213 = pneg %p212
      // Predicated region
      $region37: #{tpu_custom_call.1} parent=5 // pred_check
        _
      $region38: #{tpu_custom_call.1} parent=5 // pred_check_branch
        %215 = sbr.rel (%p212) target = $region40
      $region39: #{tpu_custom_call.1} parent=5 // pred_region
        %s216 = ssub.s32 %s14, 1
        %s217 = smul.u32 2, %s24
        %p218 = scmp.lt.s32.totalorder %s23, 1
        %s219 = scalar_select %p218, %s23, 1
        %p220 = scmp.lt.s32.totalorder %s217, 1
        %s221 = scalar_select %p220, %s217, 1
        %s222 = smul.addr %s219, 2
        %s223 = sadd.s32 %s221, %s222
        %s224 = smul.addr %s223, 4
        %s225 = scalar_lea.vmem %s0, %s224
        %p226 = pneg %p54
        %p227 = pneg %p51
        %p228 = pneg %p75
        %p229 = pneg %p72
        %p230 = pneg %p96
        %p231 = pneg %p93
        %p232 = pneg %p117
        %p233 = pneg %p114
        %p234 = pneg %p138
        %p235 = pneg %p135
        %p236 = pneg %p166
        %p237 = pneg %p163
        %s238 = sand.u32 %s153, 1
        %s239 = scalar_lea.sflag [#allocation3], %s238
        %s240 = sand.u32 %s153, 1
        %s241 = smul.addr %s240, 64
        %s242 = scalar_lea.vmem [#allocation2], %s241
        %s243 = smul.u32 2, %s24
        %p244 = scmp.lt.s32.totalorder %s23, 1
        %s245 = scalar_select %p244, %s23, 1
        %p246 = scmp.lt.s32.totalorder %s243, 1
        %s247 = scalar_select %p246, %s243, 1
        %s248 = smul.addr %s245, 2
        %s249 = sadd.s32 %s247, %s248
        %s250 = smul.addr %s249, 4
        %s251 = scalar_lea.vmem %s0, %s250
        %s252 = smul.u32 2, %s24
        %s253 = smul.u32 2, %s24
        %v254 = vld [vmem:[%s251] sm:$0xff]
        %v255 = vld [vmem:[%s1] sm:$0xff]
        %v256 = vld [vmem:[%s2] sm:$0xff]
        %258 = vset.pattern.permute.xlu0 0
        %259 = vperm.xlu0 %258, %v256
        %v260 = vpop.permute.xlu0 %259
        %v263 = vcombine.high %v254, %v254
        %vm264 = vcmask 31744
        %v266 = vsel %vm264, %v255, 0
        %vm268 = vcmask 1043456
        %v269 = vsel %vm268, %v254, 0
        %v271 = vsel %vm268, %v263, 0
        %273 = vmatprep.subr.mxu0 0.0
        %274 = vmatpush1.msra.mxu0 0.0
        %275 = vmatprep.subr.mxu0 0.0
        %276 = vmatpush1.msra.mxu0 0.0
        %277 = vmatprep.subr.mxu0 0.0
        %278 = vmatpush1.msra.mxu0 0.0
        %279 = vmatprep.subr.mxu0 0.0
        %280 = vmatpush1.msra.mxu0 0.0
        %281 = vmatprep.subr.mxu0 0.0
        %282 = vmatpush1.msra.mxu0 0.0
        %283 = vmatprep.subr.mxu0 0.0
        %284 = vmatpush1.msra.mxu0 0.0
        %285 = vmatprep.subr.mxu0 0.0
        %286 = vmatpush1.msra.mxu0 0.0
        %287 = vmatprep.subr.mxu0 0.0
        %288 = vmatpush1.msra.mxu0 0.0
        %289 = vmatprep.subr.mxu0 0.0
        %290 = vmatpush1.msra.mxu0 0.0
        %291 = vmatprep.subr.mxu0 0.0
        %292 = vmatpush1.msra.mxu0 0.0
        %293 = vmatprep.subr.mxu0 0.0
        %294 = vmatpush1.msra.mxu0 0.0
        %295 = vmatprep.subr.mxu0 0.0
        %296 = vmatpush1.msra.mxu0 0.0
        %297 = vmatprep.subr.mxu0 0.0
        %298 = vmatpush1.msra.mxu0 0.0
        %299 = vmatprep.subr.mxu0 0.0
        %300 = vmatpush1.msra.mxu0 0.0
        %301 = vmatprep.subr.mxu0 0.0
        %302 = vmatpush1.msra.mxu0 0.0
        %303 = vmatprep.subr.mxu0 %v271
        %304 = vmatpush1.msra.mxu0 %v269
        %305 = vmatprep.subr.mxu0 0.0
        %306 = vmatpush2.msra.mxu0 0.0
        %307 = vmatprep.subr.mxu0 0.0
        %308 = vmatpush2.msra.mxu0 0.0
        %309 = vmatprep.subr.mxu0 0.0
        %310 = vmatpush2.msra.mxu0 0.0
        %311 = vmatprep.subr.mxu0 0.0
        %312 = vmatpush2.msra.mxu0 0.0
        %313 = vmatprep.subr.mxu0 0.0
        %314 = vmatpush2.msra.mxu0 0.0
        %315 = vmatprep.subr.mxu0 0.0
        %316 = vmatpush2.msra.mxu0 0.0
        %317 = vmatprep.subr.mxu0 0.0
        %318 = vmatpush2.msra.mxu0 0.0
        %319 = vmatprep.subr.mxu0 0.0
        %320 = vmatpush2.msra.mxu0 0.0
        %321 = vmatprep.subr.mxu0 0.0
        %322 = vmatpush2.msra.mxu0 0.0
        %323 = vmatprep.subr.mxu0 0.0
        %324 = vmatpush2.msra.mxu0 0.0
        %325 = vmatprep.subr.mxu0 0.0
        %326 = vmatpush2.msra.mxu0 0.0
        %327 = vmatprep.subr.mxu0 0.0
        %328 = vmatpush2.msra.mxu0 0.0
        %329 = vmatprep.subr.mxu0 0.0
        %330 = vmatpush2.msra.mxu0 0.0
        %331 = vmatprep.subr.mxu0 0.0
        %332 = vmatpush2.msra.mxu0 0.0
        %333 = vmatprep.subr.mxu0 0.0
        %334 = vmatpush2.msra.mxu0 0.0
        %335 = vmatprep.subr.mxu0 0.0
        %336 = vmatpush2.msra.mxu0 0.0
        %337 = vmatprep.mubr.f32.mxu0 0.0
        %338 = vmatmul.mubr.f32.gmra.mxu0 %v266
        %v339 = vpop.f32.mrf.mxu0
        %v340 = vadd.f32 %v260, %v339
        %v341 = vpop.f32.mrf.mxu0
        %v342 = vadd.f32 %v260, %v341
        %343 = vdwg.mxu0
        %v344 = vmax.f32 %v340, 0.0
        %v345 = vmax.f32 %v342, 0.0
        %v346 = vld [vmem:[%s3] sm:$0xff]
        %v347 = vld [vmem:[%s3 + $0x8] sm:$0xff]
        %v348 = vld [vmem:[%s3 + $0x10] sm:$0xff]
        %v349 = vld [vmem:[%s3 + $0x18] sm:$0xff]
        %v350 = vld [vmem:[%s4] sm:$0xff]
        %v351 = vld [vmem:[%s4 + $0x8] sm:$0xff]
        %v352 = vld [vmem:[%s4 + $0x10] sm:$0xff]
        %v353 = vld [vmem:[%s4 + $0x18] sm:$0xff]
        %355 = vset.pattern.permute.xlu0 0
        %356 = vperm.xlu0 %355, %v350
        %v357 = vpop.permute.xlu0 %356
        %360 = vset.pattern.permute.xlu0 0
        %361 = vperm.xlu0 %360, %v351
        %v362 = vpop.permute.xlu0 %361
        %365 = vset.pattern.permute.xlu0 0
        %366 = vperm.xlu0 %365, %v352
        %v367 = vpop.permute.xlu0 %366
        %370 = vset.pattern.permute.xlu0 0
        %371 = vperm.xlu0 %370, %v353
        %v372 = vpop.permute.xlu0 %371
        %vm374 = vcmask 64512
        %v376 = vsel %vm374, %v346, 0
        %v379 = vsel %vm374, %v347, 0
        %v382 = vsel %vm374, %v348, 0
        %v385 = vsel %vm374, %v349, 0
        %387 = vmatprep.subr.mxu0 0.0
        %388 = vmatpush1.msra.mxu0 0.0
        %389 = vmatprep.subr.mxu0 0.0
        %390 = vmatpush1.msra.mxu0 0.0
        %391 = vmatprep.subr.mxu0 0.0
        %392 = vmatpush1.msra.mxu0 0.0
        %393 = vmatprep.subr.mxu0 0.0
        %394 = vmatpush1.msra.mxu0 0.0
        %395 = vmatprep.subr.mxu0 0.0
        %396 = vmatpush1.msra.mxu0 0.0
        %397 = vmatprep.subr.mxu0 0.0
        %398 = vmatpush1.msra.mxu0 0.0
        %399 = vmatprep.subr.mxu0 0.0
        %400 = vmatpush1.msra.mxu0 0.0
        %401 = vmatprep.subr.mxu0 0.0
        %402 = vmatpush1.msra.mxu0 0.0
        %403 = vmatprep.subr.mxu0 0.0
        %404 = vmatpush1.msra.mxu0 0.0
        %405 = vmatprep.subr.mxu0 0.0
        %406 = vmatpush1.msra.mxu0 0.0
        %407 = vmatprep.subr.mxu0 0.0
        %408 = vmatpush1.msra.mxu0 0.0
        %409 = vmatprep.subr.mxu0 0.0
        %410 = vmatpush1.msra.mxu0 0.0
        %411 = vmatprep.subr.mxu0 0.0
        %412 = vmatpush1.msra.mxu0 0.0
        %413 = vmatprep.subr.mxu0 0.0
        %414 = vmatpush1.msra.mxu0 0.0
        %415 = vmatprep.subr.mxu0 0.0
        %416 = vmatpush1.msra.mxu0 0.0
        %417 = vmatprep.subr.mxu0 %v345
        %418 = vmatpush1.msra.mxu0 %v344
        %419 = vmatprep.subr.mxu0 0.0
        %420 = vmatpush2.msra.mxu0 0.0
        %421 = vmatprep.subr.mxu0 0.0
        %422 = vmatpush2.msra.mxu0 0.0
        %423 = vmatprep.subr.mxu0 0.0
        %424 = vmatpush2.msra.mxu0 0.0
        %425 = vmatprep.subr.mxu0 0.0
        %426 = vmatpush2.msra.mxu0 0.0
        %427 = vmatprep.subr.mxu0 0.0
        %428 = vmatpush2.msra.mxu0 0.0
        %429 = vmatprep.subr.mxu0 0.0
        %430 = vmatpush2.msra.mxu0 0.0
        %431 = vmatprep.subr.mxu0 0.0
        %432 = vmatpush2.msra.mxu0 0.0
        %433 = vmatprep.subr.mxu0 0.0
        %434 = vmatpush2.msra.mxu0 0.0
        %435 = vmatprep.subr.mxu0 0.0
        %436 = vmatpush2.msra.mxu0 0.0
        %437 = vmatprep.subr.mxu0 0.0
        %438 = vmatpush2.msra.mxu0 0.0
        %439 = vmatprep.subr.mxu0 0.0
        %440 = vmatpush2.msra.mxu0 0.0
        %441 = vmatprep.subr.mxu0 0.0
        %442 = vmatpush2.msra.mxu0 0.0
        %443 = vmatprep.subr.mxu0 0.0
        %444 = vmatpush2.msra.mxu0 0.0
        %445 = vmatprep.subr.mxu0 0.0
        %446 = vmatpush2.msra.mxu0 0.0
        %447 = vmatprep.subr.mxu0 0.0
        %448 = vmatpush2.msra.mxu0 0.0
        %449 = vmatprep.subr.mxu0 0.0
        %450 = vmatpush2.msra.mxu0 0.0
        %451 = vmatprep.mubr.f32.mxu0 0.0
        %452 = vmatmul.mubr.f32.gmra.mxu0 %v376
        %v453 = vpop.f32.mrf.mxu0
        %v454 = vadd.f32 %v357, %v453
        %v455 = vpop.f32.mrf.mxu0
        %v456 = vadd.f32 %v357, %v455
        %457 = vmatprep.mubr.f32.mxu0 0.0
        %458 = vmatmul.mubr.f32.gmra.mxu0 %v379
        %v459 = vpop.f32.mrf.mxu0
        %v460 = vadd.f32 %v362, %v459
        %v461 = vpop.f32.mrf.mxu0
        %v462 = vadd.f32 %v362, %v461
        %463 = vmatprep.mubr.f32.mxu0 0.0
        %464 = vmatmul.mubr.f32.gmra.mxu0 %v382
        %v465 = vpop.f32.mrf.mxu0
        %v466 = vadd.f32 %v367, %v465
        %v467 = vpop.f32.mrf.mxu0
        %v468 = vadd.f32 %v367, %v467
        %469 = vmatprep.mubr.f32.mxu0 0.0
        %470 = vmatmul.mubr.f32.gmra.mxu0 %v385
        %v471 = vpop.f32.mrf.mxu0
        %v472 = vadd.f32 %v372, %v471
        %v473 = vpop.f32.mrf.mxu0
        %v474 = vadd.f32 %v372, %v473
        %475 = vdwg.mxu0
        %v476 = vmax.f32 %v454, 0.0
        %v477 = vmax.f32 %v456, 0.0
        %v478 = vmax.f32 %v460, 0.0
        %v479 = vmax.f32 %v462, 0.0
        %v480 = vmax.f32 %v466, 0.0
        %v481 = vmax.f32 %v468, 0.0
        %v482 = vmax.f32 %v472, 0.0
        %v483 = vmax.f32 %v474, 0.0
        %484 = vst [vmem:[%s242] sm:$0xff] %v476
        %485 = vst [vmem:[%s242 + $0x8] sm:$0xff] %v477
        %486 = vst [vmem:[%s242 + $0x10] sm:$0xff] %v478
        %487 = vst [vmem:[%s242 + $0x18] sm:$0xff] %v479
        %488 = vst [vmem:[%s242 + $0x20] sm:$0xff] %v480
        %489 = vst [vmem:[%s242 + $0x28] sm:$0xff] %v481
        %490 = vst [vmem:[%s242 + $0x30] sm:$0xff] %v482
        %491 = vst [vmem:[%s242 + $0x38] sm:$0xff] %v483
        %s492 = sand.u32 %s153, 1
        %s493 = scalar_lea.sflag [#allocation3], %s492
        %s494 = sand.u32 %s153, 1
        %s495 = smul.addr %s494, 64
        %s496 = scalar_lea.vmem [#allocation2], %s495
        // Predicated region
        $region41: #{tpu_custom_call.1} parent=39 // pred_check
          %p497 = pneg %p163
        $region42: #{tpu_custom_call.1} parent=39 // pred_check_branch
          %499 = sbr.rel (%p497) target = $region44
        $region43: #{tpu_custom_call.1} parent=39 // pred_region
          %s500 = smul.u32 2, %s24
          %s502 = ssub.s32 1024, 1024
          %503 = vsyncadd %s493, %s502
          %s504 = smul.addr %s23, 8
          %s505 = sadd.s32 %s500, %s504
          %s506 = smul.addr %s505, 128
          %s507 = scalar_lea.hbm %s5, %s506
          %s508 = sshll.u32 %s496, 4
          %s509 = int_to_ptr.vmem [resolvable:$true] %s508
          %514 = dma.vmem_to_hbm [thread:$0]  %s509, 1024, %s507, %s493, 256, 256, 16
        $region44: #{tpu_custom_call.1} parent=39 // pred_fallthru
          _
      $region40: #{tpu_custom_call.1} parent=5 // pred_fallthru
        _
      %p515 = scmp.le.s32.totalorder 2, %s14
      // Predicated region
      $region45: #{tpu_custom_call.1} parent=5 // pred_check
        %p516 = pneg %p515
      $region46: #{tpu_custom_call.1} parent=5 // pred_check_branch
        %518 = sbr.rel (%p516) target = $region48
      $region47: #{tpu_custom_call.1} parent=5 // pred_region
        %s519 = ssub.s32 %s14, 2
        // Predicated region
        $region49: #{tpu_custom_call.1} parent=47 // pred_check
          %p520 = pneg %p169
        $region50: #{tpu_custom_call.1} parent=47 // pred_check_branch
          %522 = sbr.rel (%p520) target = $region52
        $region51: #{tpu_custom_call.1} parent=47 // pred_region
          %s523 = sand.u32 %s154, 1
          %s524 = scalar_lea.sflag [#allocation3], %s523
          %s525 = sand.u32 %s154, 1
          %s526 = smul.addr %s525, 64
          %s527 = scalar_lea.vmem [#allocation2], %s526
          %528 = dma.done %s524, 1024
        $region52: #{tpu_custom_call.1} parent=47 // pred_fallthru
          _
      $region48: #{tpu_custom_call.1} parent=5 // pred_fallthru
        _
    $region6: #{tpu_custom_call.1} parent=1 // loop_footer
      %s18 = sadd.s32 1, %s14
    $region7: #{tpu_custom_call.1} parent=1 // loop_footer_branch
      %13 = sbr.rel target = $region3
    $region8: #{tpu_custom_call.1} parent=1 // loop_exit
      _
    %529 = vsyncpa [#allocation3], 1
    %s530 = scalar_lea.sflag [#allocation3], 1
    %531 = vsyncpa %s530, 1

</llo_original>
